<compile_context>
chip_gen: v5e
topology: v5e:2x2
jax: 0.10.0
libtpu: 0.0.40
codegen_flags: <defaults>
</compile_context>

<pallas_src>
import functools

import jax
import jax.numpy as jnp
from jax.experimental import pallas as pl
from jax.experimental.pallas import tpu as pltpu

_LANES = 128
_SUBLANES = 8
_TARGET_BLOCK_ROWS = 4096  # (4096, 128) f32 = 2 MiB per stream per buffer


def _round_up(x, m):
    return (x + m - 1) // m * m


def _int_pow(x, g):
    """x ** g for non-negative integer g via repeated multiplication (no pow)."""
    if g == 0:
        return jnp.ones_like(x)
    result = None
    base = x
    while True:
        if g & 1:
            result = base if result is None else result * base
        g >>= 1
        if not g:
            return result
        base = base * base


def _focal_loss_kernel(pred_ref, tgt_ref, out_ref, *, gamma, n_valid,
                       block_rows, acc_rows, steps, mask_from_block):
    c = pl.program_id(0)   # parallel split (both TensorCores on v7x)
    i = pl.program_id(1)   # sequential reduction axis
    blk = c * steps + i    # logical block index; may exceed the real block
                           # count by one (phantom block, zeroed by the mask)

    @pl.when(i == 0)
    def _():
        out_ref[...] = jnp.zeros_like(out_ref)

    x = pred_ref[...].astype(jnp.float32)
    t = tgt_ref[...].astype(jnp.float32)

    # One exp serves both the numerically stable sigmoid and the stable
    # BCE-with-logits (matches F.binary_cross_entropy_with_logits).
    e = jnp.exp(-jnp.abs(x))                      # exp(-|x|) in (0, 1]
    a = 1.0 + e
    r = pl.reciprocal(a, approx=True)             # EUP slot; VALU kept free
    r = r * (2.0 - a * r)                         # one Newton step -> ~f32 accuracy
    probs = jnp.where(x >= 0.0, r, e * r)         # sigmoid(x)
    bce = jnp.maximum(x, 0.0) - x * t + jnp.log1p(e)

    # 1 - p_t == probs + t - 2*probs*t (identical for t in [0,1], fewer VALU ops)
    d = probs + t * (1.0 - 2.0 * probs)
    if float(gamma).is_integer() and 0 <= int(gamma) <= 16:
        w = _int_pow(d, int(gamma))               # gamma=2 -> d*d (no pow/log)
    else:
        w = d ** float(gamma)
    focal = w * bce                               # alpha applied in the wrapper

    def accumulate(vals):
        # Tile-aligned fold onto the resident (acc_rows, 128) accumulator:
        # pure VPU adds, no cross-lane reduce, acc_rows/8 independent chains.
        partial = vals.reshape(block_rows // acc_rows, acc_rows, _LANES).sum(axis=0)
        out_ref[...] += partial[None]

    if mask_from_block is None:
        # Exact coverage everywhere: no mask math on any block.
        accumulate(focal)
    else:
        needs_mask = blk >= mask_from_block

        @pl.when(needs_mask)
        def _():
            # Row-based comparison (no elem*128 int32 overflow on huge inputs).
            n_full_rows = n_valid // _LANES
            rem = n_valid % _LANES
            riota = jax.lax.broadcasted_iota(jnp.int32, focal.shape, 0)
            grow = blk * block_rows + riota
            if rem:
                liota = jax.lax.broadcasted_iota(jnp.int32, focal.shape, 1)
                valid = (grow < n_full_rows) | ((grow == n_full_rows) & (liota < rem))
            else:
                valid = grow < n_full_rows
            accumulate(jnp.where(valid, focal, 0.0))

        @pl.when(jnp.logical_not(needs_mask))
        def _():
            accumulate(focal)


def focal_loss(predictions, targets, *, alpha=1.0, gamma=2.0):
    """Sigmoid focal loss with 'mean' reduction (NCHW or any shape)."""
    assert predictions.shape == targets.shape
    n_valid = int(predictions.size)

    flat_p = predictions.reshape(-1)   # native dtype; cast to f32 in-kernel
    flat_t = targets.reshape(-1)

    # Only 128-lane alignment padding (<= 127 elements); no mask stream.
    lane_pad = (-n_valid) % _LANES
    if lane_pad:
        flat_p = jnp.pad(flat_p, (0, lane_pad))
        flat_t = jnp.pad(flat_t, (0, lane_pad))
    rows = (n_valid + lane_pad) // _LANES

    p2 = flat_p.reshape(rows, _LANES)
    t2 = flat_t.reshape(rows, _LANES)

    block_rows = min(_TARGET_BLOCK_ROWS, _round_up(rows, _SUBLANES))
    # Wider resident accumulator when the block divides it (better ILP).
    acc_rows = 64 if block_rows % 64 == 0 else _SUBLANES

    total_blocks = -(-rows // block_rows)
    # Always split when >1 block so both v7x TensorCores work even for odd
    # block counts; neutral on single-TC v5e/v6e (c becomes a serial loop).
    n_split = 2 if total_blocks >= 2 else 1
    steps = -(-total_blocks // n_split)
    phantom = (n_split * steps != total_blocks)          # clamped extra block
    data_tail = (total_blocks * block_rows * _LANES != n_valid)

    if data_tail:
        mask_from_block = total_blocks - 1   # last real block has a tail
    elif phantom:
        mask_from_block = total_blocks       # only the phantom block is masked
    else:
        mask_from_block = None               # exact coverage: never mask

    kernel = functools.partial(
        _focal_loss_kernel, gamma=float(gamma), n_valid=n_valid,
        block_rows=block_rows, acc_rows=acc_rows, steps=steps,
        mask_from_block=mask_from_block)

    if phantom:
        last_block = total_blocks - 1
        def in_map(c, i):
            return (jnp.minimum(c * steps + i, last_block), 0)
    else:
        def in_map(c, i):
            return (c * steps + i, 0)
    in_spec = pl.BlockSpec((block_rows, _LANES), in_map)

    bytes_accessed = int(p2.size * p2.dtype.itemsize
                         + t2.size * t2.dtype.itemsize
                         + n_split * acc_rows * _LANES * 4)

    partials = pl.pallas_call(
        kernel,
        out_shape=jax.ShapeDtypeStruct((n_split, acc_rows, _LANES), jnp.float32),
        grid_spec=pltpu.PrefetchScalarGridSpec(
            num_scalar_prefetch=0,
            grid=(n_split, steps),
            in_specs=[in_spec, in_spec],
            out_specs=pl.BlockSpec((1, acc_rows, _LANES), lambda c, i: (c, 0, 0)),
        ),
        compiler_params=pltpu.CompilerParams(
            dimension_semantics=("parallel", "arbitrary"),
            vmem_limit_bytes=48 << 20),
        cost_estimate=pl.CostEstimate(
            flops=20 * n_valid,
            transcendentals=2 * n_valid,
            bytes_accessed=bytes_accessed),
    )(p2, t2)

    # reduction='mean' over the ORIGINAL element count; alpha applied once here.
    return (jnp.sum(partials) / jnp.float32(n_valid)) * jnp.float32(alpha)
    # TODO(synk): reduction='sum'/'none' variants of the module are not exposed here.


def focal_loss_ref(predictions, targets, *, alpha=1.0, gamma=2.0):
    """Pure-JAX reference mirroring the PyTorch module (reduction='mean')."""
    x = predictions.astype(jnp.float32)
    t = targets.astype(jnp.float32)
    probs = jax.nn.sigmoid(x)
    bce = jnp.maximum(x, 0.0) - x * t + jnp.log1p(jnp.exp(-jnp.abs(x)))
    p_t = probs * t + (1.0 - probs) * (1.0 - t)
    focal = alpha * (1.0 - p_t) ** gamma * bce
    return jnp.mean(focal)


if __name__ == "__main__":
    key = jax.random.PRNGKey(0)
    kp, kt = jax.random.split(key)

    # NCHW segmentation-style logits and binary targets.
    x = jax.random.normal(kp, (2, 4, 16, 16), dtype=jnp.float32) * 2.0
    t = (jax.random.uniform(kt, (2, 4, 16, 16)) > 0.5).astype(jnp.float32)

    loss = focal_loss(x, t, alpha=1.0, gamma=2.0)
    loss = jax.block_until_ready(loss)

    ref = focal_loss_ref(x, t, alpha=1.0, gamma=2.0)
    assert jnp.allclose(loss, ref, rtol=1e-5, atol=1e-6), (loss, ref)

    print("KERNEL_OK")
</pallas_src>

<mosaic_0001>
module attributes {stable_mosaic.version = 11 : i64} {
  func.func @_focal_loss_kernel(%arg0: i32, %arg1: i32, %arg2: memref<16x128xf32, #tpu.memory_space<vmem>>, %arg3: memref<16x128xf32, #tpu.memory_space<vmem>>, %arg4: memref<1x8x128xf32, #tpu.memory_space<vmem>>) attributes {dimension_semantics = [#tpu.dimension_semantics<parallel>, #tpu.dimension_semantics<arbitrary>], iteration_bounds = array<i64: 1, 1>, scalar_prefetch = 0 : i64, scratch_operands = 0 : i64, tpu.core_type = #tpu.core_type<tc>, window_params = [{transform_indices = @transform_0, window_bounds = array<i64: 16, 128>}, {transform_indices = @transform_1, window_bounds = array<i64: 16, 128>}, {transform_indices = @transform_2, window_bounds = array<i64: 1, 8, 128>}]} {
    %c0_i32 = arith.constant 0 : i32
    %0 = arith.cmpi eq, %arg1, %c0_i32 : i32
    %1 = arith.extui %0 : i1 to i32
    %c0_i32_0 = arith.constant 0 : i32
    %2 = arith.cmpi ne, %1, %c0_i32_0 : i32
    scf.if %2 {
      %cst_17 = arith.constant 0.000000e+00 : f32
      %40 = vector.broadcast %cst_17 : f32 to vector<1x8x128xf32>
      %c0_18 = arith.constant 0 : index
      %c0_19 = arith.constant 0 : index
      %c0_20 = arith.constant 0 : index
      %41 = vector.load %arg4[%c0_18, %c0_19, %c0_20] : memref<1x8x128xf32, #tpu.memory_space<vmem>>, vector<1x8x128xf32>
      tpu.vector_store %arg4[%c0_18, %c0_19, %c0_20], %40 {strides = array<i32>} : memref<1x8x128xf32, #tpu.memory_space<vmem>>, vector<1x8x128xf32>,
    } else {
    }
    %c0 = arith.constant 0 : index
    %c0_1 = arith.constant 0 : index
    %3 = vector.load %arg2[%c0, %c0_1] : memref<16x128xf32, #tpu.memory_space<vmem>>, vector<16x128xf32>
    %c0_2 = arith.constant 0 : index
    %c0_3 = arith.constant 0 : index
    %4 = vector.load %arg3[%c0_2, %c0_3] : memref<16x128xf32, #tpu.memory_space<vmem>>, vector<16x128xf32>
    %5 = math.absf %3 : vector<16x128xf32>
    %cst = arith.constant 0.000000e+00 : f32
    %6 = vector.broadcast %cst : f32 to vector<16x128xf32>
    %7 = arith.subf %6, %5 : vector<16x128xf32>
    %8 = math.exp %7 : vector<16x128xf32>
    %cst_4 = arith.constant 1.000000e+00 : f32
    %9 = vector.broadcast %cst_4 : f32 to vector<16x128xf32>
    %10 = arith.addf %9, %8 : vector<16x128xf32>
    %11 = tpu.reciprocal %10 {approx = true} : vector<16x128xf32> -> vector<16x128xf32>
    %12 = arith.mulf %10, %11 : vector<16x128xf32>
    %cst_5 = arith.constant 2.000000e+00 : f32
    %13 = vector.broadcast %cst_5 : f32 to vector<16x128xf32>
    %14 = arith.subf %13, %12 : vector<16x128xf32>
    %15 = arith.mulf %11, %14 : vector<16x128xf32>
    %cst_6 = arith.constant 0.000000e+00 : f32
    %16 = vector.broadcast %cst_6 : f32 to vector<16x128xf32>
    %17 = arith.cmpf oge, %3, %16 : vector<16x128xf32>
    %18 = arith.mulf %8, %15 : vector<16x128xf32>
    %19 = arith.select %17, %15, %18 : vector<16x128xi1>, vector<16x128xf32>
    %cst_7 = arith.constant 0.000000e+00 : f32
    %20 = vector.broadcast %cst_7 : f32 to vector<16x128xf32>
    %21 = arith.maximumf %3, %20 : vector<16x128xf32>
    %22 = arith.mulf %3, %4 : vector<16x128xf32>
    %23 = arith.subf %21, %22 : vector<16x128xf32>
    %24 = math.log1p %8 : vector<16x128xf32>
    %25 = arith.addf %23, %24 : vector<16x128xf32>
    %cst_8 = arith.constant 2.000000e+00 : f32
    %26 = vector.broadcast %cst_8 : f32 to vector<16x128xf32>
    %27 = arith.mulf %26, %19 : vector<16x128xf32>
    %cst_9 = arith.constant 1.000000e+00 : f32
    %28 = vector.broadcast %cst_9 : f32 to vector<16x128xf32>
    %29 = arith.subf %28, %27 : vector<16x128xf32>
    %30 = arith.mulf %4, %29 : vector<16x128xf32>
    %31 = arith.addf %19, %30 : vector<16x128xf32>
    %32 = arith.mulf %31, %31 : vector<16x128xf32>
    %33 = arith.mulf %32, %25 : vector<16x128xf32>
    %34 = vector.shape_cast %33 : vector<16x128xf32> to vector<2x8x128xf32>
    %cst_10 = arith.constant dense<0.000000e+00> : vector<8x128xf32>
    %35 = vector.multi_reduction <add>, %34, %cst_10 [0] : vector<2x8x128xf32> to vector<8x128xf32>
    %c0_11 = arith.constant 0 : index
    %c0_12 = arith.constant 0 : index
    %c0_13 = arith.constant 0 : index
    %36 = vector.load %arg4[%c0_11, %c0_12, %c0_13] : memref<1x8x128xf32, #tpu.memory_space<vmem>>, vector<1x8x128xf32>
    %37 = vector.shape_cast %35 : vector<8x128xf32> to vector<1x8x128xf32>
    %38 = arith.addf %36, %37 : vector<1x8x128xf32>
    %c0_14 = arith.constant 0 : index
    %c0_15 = arith.constant 0 : index
    %c0_16 = arith.constant 0 : index
    %39 = vector.load %arg4[%c0_14, %c0_15, %c0_16] : memref<1x8x128xf32, #tpu.memory_space<vmem>>, vector<1x8x128xf32>
    tpu.vector_store %arg4[%c0_14, %c0_15, %c0_16], %38 {strides = array<i32>} : memref<1x8x128xf32, #tpu.memory_space<vmem>>, vector<1x8x128xf32>,
    return
  }
  func.func @transform_0(%arg0: i32, %arg1: i32) -> (i32, i32) {
    %c1_i32 = arith.constant 1 : i32
    %0 = arith.muli %arg0, %c1_i32 : i32
    %1 = arith.addi %0, %arg1 : i32
    %c0_i32 = arith.constant 0 : i32
    %c0_i32_0 = arith.constant 0 : i32
    return %1, %c0_i32 : i32, i32
  }
  func.func @transform_1(%arg0: i32, %arg1: i32) -> (i32, i32) {
    %c1_i32 = arith.constant 1 : i32
    %0 = arith.muli %arg0, %c1_i32 : i32
    %1 = arith.addi %0, %arg1 : i32
    %c0_i32 = arith.constant 0 : i32
    %c0_i32_0 = arith.constant 0 : i32
    return %1, %c0_i32 : i32, i32
  }
  func.func @transform_2(%arg0: i32, %arg1: i32) -> (i32, i32, i32) {
    %c0_i32 = arith.constant 0 : i32
    %c0_i32_0 = arith.constant 0 : i32
    %c0_i32_1 = arith.constant 0 : i32
    return %arg0, %c0_i32, %c0_i32_0 : i32, i32, i32
  }
}

</mosaic_0001>

<llo_original>
// kernel: tpu_custom_call.1
$region0: #{tpu_custom_call.1}
  #allocation0 [shape = 'u32[]', space=smem, size = 0x4, offset = 0x4, fixed_abs, tag = 'smem constant byte address 0x4 - core index']
  #allocation1 [shape = 'u32[72,128]{1,0:T(1,128)}', space=vmem, size = 0x9000, scoped, tag = 'internal scratch']
  %s0 = inlined_call_operand.hbm [shape: f32[16,128], index: 0, kind: input, shape index: {}]
  %s1 = inlined_call_operand.hbm [shape: f32[16,128], index: 1, kind: input, shape index: {}]
  %s2 = inlined_call_operand.hbm [shape: f32[1,8,128], index: 2, kind: output, shape index: {}]
  %s3 = sld [smem:[#allocation0]]
  $region30: #{tpu_custom_call.1} parent=0
    _
  %s5 = ssub.s32 1, %s3
  %s6 = scalar_select 0, %s5, %s3
  $region1: #{tpu_custom_call.1} parent=0
    #allocation2 [shape = 'u8[8192]{0}', space=vmem, size = 0x2000, scoped, tag = 'input window, operand 0, single buffered']
    #allocation3 [shape = 's32[1]{0}', space=sflag, size = 0x4, scoped, tag = 'scoped memory for tpu_custom_call.1']
    #allocation4 [shape = 's32[1]{0}', space=sflag, size = 0x4, scoped, tag = 'scoped memory for tpu_custom_call.1']
    #allocation5 [shape = 'u8[8192]{0}', space=vmem, size = 0x2000, scoped, tag = 'input window, operand 1, single buffered']
    #allocation6 [shape = 's32[1]{0}', space=sflag, size = 0x4, scoped, tag = 'scoped memory for tpu_custom_call.1']
    #allocation7 [shape = 'u8[4096]{0}', space=vmem, size = 0x1000, scoped, tag = 'output window, operand 0, single buffered']
    %7 = vsyncpa [#allocation3], 0
    %8 = vsyncpa [#allocation6], 0
    %9 = vsyncpa [#allocation4], 0
    // Predicated region
    $region2: #{tpu_custom_call.1} parent=1 // pred_check
      _
    $region3: #{tpu_custom_call.1} parent=1 // pred_check_branch
      %11 = sbr.rel (0) target = $region5
    $region4: #{tpu_custom_call.1} parent=1 // pred_region
      %s12 = sadd.s32 0, 0
      %s13 = smul.u32 2, %s12
      %15 = vsyncadd [#allocation3], 0
      %s16 = smul.addr %s13, 8
      %s17 = scalar_lea.hbm %s0, %s16
      %s18 = sshll.u32 %s17, 4
      %s19 = int_to_ptr.hbm [resolvable:$true] %s18
      %s20 = sshll.u32 [#allocation2], 4
      %s21 = int_to_ptr.vmem [resolvable:$true] %s20
      %26 = dma.hbm_to_vmem [thread:$0]  %s19, 256, %s21, [#allocation3], 128, 128, 8
    $region5: #{tpu_custom_call.1} parent=1 // pred_fallthru
      _
    // Predicated region
    $region6: #{tpu_custom_call.1} parent=1 // pred_check
      _
    $region7: #{tpu_custom_call.1} parent=1 // pred_check_branch
      %28 = sbr.rel (0) target = $region9
    $region8: #{tpu_custom_call.1} parent=1 // pred_region
      %s29 = sadd.s32 0, 0
      %s30 = smul.u32 2, %s29
      %32 = vsyncadd [#allocation6], 0
      %s33 = smul.addr %s30, 8
      %s34 = scalar_lea.hbm %s1, %s33
      %s35 = sshll.u32 %s34, 4
      %s36 = int_to_ptr.hbm [resolvable:$true] %s35
      %s37 = sshll.u32 [#allocation5], 4
      %s38 = int_to_ptr.vmem [resolvable:$true] %s37
      %43 = dma.hbm_to_vmem [thread:$0]  %s36, 256, %s38, [#allocation6], 128, 128, 8
    $region9: #{tpu_custom_call.1} parent=1 // pred_fallthru
      _
    // Predicated region
    $region10: #{tpu_custom_call.1} parent=1 // pred_check
      _
    $region11: #{tpu_custom_call.1} parent=1 // pred_check_branch
      %45 = sbr.rel (0) target = $region13
    $region12: #{tpu_custom_call.1} parent=1 // pred_region
      %47 = dma.done [#allocation3], 256
    $region13: #{tpu_custom_call.1} parent=1 // pred_fallthru
      _
    // Predicated region
    $region14: #{tpu_custom_call.1} parent=1 // pred_check
      _
    $region15: #{tpu_custom_call.1} parent=1 // pred_check_branch
      %49 = sbr.rel (0) target = $region17
    $region16: #{tpu_custom_call.1} parent=1 // pred_region
      %51 = dma.done [#allocation6], 256
    $region17: #{tpu_custom_call.1} parent=1 // pred_fallthru
      _
    %s52 = sadd.s32 0, 0
    %s53 = smul.u32 2, %s52
    %s54 = sadd.s32 0, 0
    %s55 = smul.u32 2, %s54
    %p56 = scmp.eq.s32.totalorder 0, 0
    // Predicated region
    $region18: #{tpu_custom_call.1} parent=1 // pred_check
      %p57 = pneg %p56
    $region19: #{tpu_custom_call.1} parent=1 // pred_check_branch
      %59 = sbr.rel (%p57) target = $region21
    $region20: #{tpu_custom_call.1} parent=1 // pred_region
      %60 = vst [vmem:[#allocation7] sm:$0xff] 0.0
    $region21: #{tpu_custom_call.1} parent=1 // pred_fallthru
      _
    %v61 = vld [vmem:[#allocation2] sm:$0xff]
    %v62 = vld [vmem:[#allocation2 + $0x8] sm:$0xff]
    %v63 = vld [vmem:[#allocation5] sm:$0xff]
    %v64 = vld [vmem:[#allocation5 + $0x8] sm:$0xff]
    %v65 = vand.u32 2147483647, %v61
    %v66 = vand.u32 2147483647, %v62
    %v67 = vsub.f32 0.0, %v65
    %v68 = vsub.f32 0.0, %v66
    %v69 = vmul.f32 %v67, 1.442695
    %v70 = vpow.pop %v69
    %v71 = vmul.f32 %v68, 1.442695
    %v72 = vpow.pop %v71
    %v73 = vadd.f32 %v70, 1.0
    %v74 = vadd.f32 %v72, 1.0
    %v75 = vrcp.pop %v73
    %v76 = vrcp.pop %v74
    %v77 = vmul.f32 %v73, %v75
    %v78 = vmul.f32 %v74, %v76
    %v79 = vsub.f32 2.0, %v77
    %v80 = vsub.f32 2.0, %v78
    %v81 = vmul.f32 %v75, %v79
    %v82 = vmul.f32 %v76, %v80
    %vm83 = vcmp.ge.f32.partialorder %v61, 0.0
    %vm84 = vcmp.ge.f32.partialorder %v62, 0.0
    %v85 = vmul.f32 %v70, %v81
    %v86 = vmul.f32 %v72, %v82
    %v87 = vsel %vm83, %v81, %v85
    %v88 = vsel %vm84, %v82, %v86
    %v89 = vmax.f32 %v61, 0.0
    %v90 = vmax.f32 %v62, 0.0
    %v91 = vmul.f32 %v61, %v63
    %v92 = vmul.f32 %v62, %v64
    %v93 = vsub.f32 %v89, %v91
    %v94 = vsub.f32 %v90, %v92
    %v95 = vadd.f32 %v70, 1.0
    %v96 = vlog2.pop %v95
    %v97 = vmul.f32 %v96, 0.6931472
    %v98 = vmul.f32 -0.5, %v70
    %v99 = vadd.f32 %v98, 1.0
    %v100 = vmul.f32 %v99, %v70
    %v101 = vand.u32 2147483647, %v70
    %vm102 = vcmp.lt.f32.partialorder %v101, 0.0004427343
    %v103 = vsel %vm102, %v100, %v97
    %v104 = vadd.f32 %v72, 1.0
    %v105 = vlog2.pop %v104
    %v106 = vmul.f32 %v105, 0.6931472
    %v107 = vmul.f32 -0.5, %v72
    %v108 = vadd.f32 %v107, 1.0
    %v109 = vmul.f32 %v108, %v72
    %v110 = vand.u32 2147483647, %v72
    %vm111 = vcmp.lt.f32.partialorder %v110, 0.0004427343
    %v112 = vsel %vm111, %v109, %v106
    %v113 = vadd.f32 %v93, %v103
    %v114 = vadd.f32 %v94, %v112
    %v115 = vmul.f32 %v87, 2.0
    %v116 = vmul.f32 %v88, 2.0
    %v117 = vsub.f32 1.0, %v115
    %v118 = vsub.f32 1.0, %v116
    %v119 = vmul.f32 %v63, %v117
    %v120 = vmul.f32 %v64, %v118
    %v121 = vadd.f32 %v87, %v119
    %v122 = vadd.f32 %v88, %v120
    %v123 = vmul.f32 %v121, %v121
    %v124 = vmul.f32 %v122, %v122
    %v125 = vmul.f32 %v123, %v113
    %v126 = vmul.f32 %v124, %v114
    %v127 = vadd.f32 %v125, %v126
    %v128 = vld [vmem:[#allocation7] sm:$0xff]
    %v129 = vadd.f32 %v128, %v127
    %130 = vst [vmem:[#allocation7] sm:$0xff] %v129
    // Predicated region
    $region22: #{tpu_custom_call.1} parent=1 // pred_check
      _
    $region23: #{tpu_custom_call.1} parent=1 // pred_check_branch
      %132 = sbr.rel (0) target = $region25
    $region24: #{tpu_custom_call.1} parent=1 // pred_region
      %134 = vsyncadd [#allocation4], 0
      %s136 = sshll.u32 [#allocation7], 4
      %s137 = int_to_ptr.vmem [resolvable:$true] %s136
      %s138 = sshll.u32 %s2, 4
      %s139 = int_to_ptr.hbm [resolvable:$true] %s138
      %141 = dma.vmem_to_hbm [thread:$0]  %s137, 128, %s139, [#allocation4]
    $region25: #{tpu_custom_call.1} parent=1 // pred_fallthru
      _
    // Predicated region
    $region26: #{tpu_custom_call.1} parent=1 // pred_check
      _
    $region27: #{tpu_custom_call.1} parent=1 // pred_check_branch
      %143 = sbr.rel (0) target = $region29
    $region28: #{tpu_custom_call.1} parent=1 // pred_region
      %145 = dma.done [#allocation4], 128
    $region29: #{tpu_custom_call.1} parent=1 // pred_fallthru
      _
    %146 = vsyncpa [#allocation3], 1
    %147 = vsyncpa [#allocation6], 1
    %148 = vsyncpa [#allocation4], 1

</llo_original>
